<compile_context>
chip_gen: v5e
topology: v5e:2x2
jax: 0.10.0
libtpu: 0.0.40
codegen_flags: <defaults>
</compile_context>

<pallas_src>
import functools

import jax
import jax.numpy as jnp
from jax.experimental import pallas as pl
from jax.experimental.pallas import tpu as pltpu


def _fused_conv_bn_silu_kernel(x_ref, w_ref, shift_ref, o_ref, acc_ref,
                               *, K, padding, nb, use_mxu):
    # x_ref:     (nb, C_in, L)              f32  -- original layout, full row per step
    # w_ref:     (K, C_out_pad, C_in)       f32  -- BN scale already folded in
    # shift_ref: (C_out_pad, 1)             f32  -- bias*scale + beta - mean*scale
    # o_ref:     (nb, C_out_pad, L_out_pad) out  -- lane-dense NCL output (padded)
    # acc_ref:   (C_out_pad, L_out_pad)     f32 scratch accumulator
    C_in = x_ref.shape[1]
    L = x_ref.shape[2]
    L_out_pad = o_ref.shape[2]
    shift = shift_ref[...]                                   # (C_out_pad, 1)

    for b in range(nb):                                      # static unroll, nb small
        x_row = x_ref[b].astype(jnp.float32)                 # (C_in, L)
        acc_ref[...] = jnp.zeros_like(acc_ref)               # pad columns stay 0 -> y = shift
        for k in range(K):                                   # static unroll
            wk = w_ref[k].astype(jnp.float32)                # (C_out_pad, C_in)
            if use_mxu:
                part = jnp.dot(wk, x_row, preferred_element_type=jnp.float32)
            else:
                # Tiny channel counts: unrolled VPU outer-product FMA instead of a
                # <1%-utilized MXU tile (per perf review).
                part = wk[:, 0:1] * x_row[0:1, :]
                for ci in range(1, C_in):
                    part = part + wk[:, ci:ci + 1] * x_row[ci:ci + 1, :]
            # Tap k's contribution to output column l comes from x column l + k - padding,
            # so `part` (covering x columns [0, L)) lands at output columns
            # [padding - k, padding - k + L), clipped to the padded output width.
            start = padding - k
            lo = max(start, 0)
            hi = min(start + L, L_out_pad)
            if hi > lo:
                cur = acc_ref[:, lo:hi]
                acc_ref[:, lo:hi] = cur + part[:, lo - start:hi - start]
        y = acc_ref[...] + shift                             # (C_out_pad, L_out_pad)
        o_ref[b] = (y * jax.nn.sigmoid(y)).astype(o_ref.dtype)   # SiLU
    # TODO(synk): Dropout(p=0.2) in training mode (pltpu.prng_seed + prng_random_bits
    #             mask + 1/(1-p) rescale) not implemented; eval mode = identity.


def conv1d_bn_silu(x, weight, bias, gamma, beta, running_mean, running_var,
                   *, stride=1, padding=9, eps=1e-5, out_dtype=None,
                   pad_output=False):
    """x: (N, C_in, L) float32.  Returns (N, C_out, L_out) in NCL layout.

    out_dtype defaults to x.dtype (f32 parity with the PyTorch module); pass
    jnp.bfloat16 to halve output HBM traffic if the consumer accepts it.
    pad_output=True returns the lane-padded (N, C_out_pad, L_out_pad) slab and skips
    the trailing un-pad slice (which is an extra HBM round-trip of the output).
    """
    N, C_in, L = x.shape
    C_out, _, K = weight.shape
    if stride != 1:
        # TODO(synk): stride > 1 unsupported in the Pallas path; module default is 1.
        raise NotImplementedError("conv1d_bn_silu Pallas path supports stride=1 only")
    L_out = (L + 2 * padding - K) // stride + 1
    out_dtype = x.dtype if out_dtype is None else out_dtype

    # ---- fold BatchNorm (eval) into weight / shift on the host (tiny arrays) ----
    s = gamma / jnp.sqrt(running_var + eps)                  # (C_out,)
    w_folded = weight * s[:, None, None]                     # (C_out, C_in, K)
    shift = bias * s + beta - running_mean * s               # (C_out,)

    # ---- layout ----
    C_out_pad = max(8, pl.cdiv(C_out, 8) * 8)                # f32 sublane quantum
    L_out_pad = pl.cdiv(L_out, 128) * 128                    # lane-dense output width

    wb = jnp.zeros((K, C_out_pad, C_in), jnp.float32)
    wb = wb.at[:, :C_out, :].set(jnp.transpose(w_folded, (2, 0, 1)).astype(jnp.float32))
    shift_b = jnp.zeros((C_out_pad, 1), jnp.float32).at[:C_out, 0].set(
        shift.astype(jnp.float32))

    # ---- rows per step: big slabs (amortize per-step overhead), >= 2 parallel steps ----
    x_isz = jnp.dtype(x.dtype).itemsize
    out_isz = jnp.dtype(out_dtype).itemsize
    bytes_per_row = C_in * L * x_isz + C_out_pad * L_out_pad * out_isz
    want = max(1, (1 << 20) // max(bytes_per_row, 1))        # ~1 MiB/step target
    nb = 1
    for d in range(1, N + 1):
        if N % d == 0 and d <= want and (N // d) >= min(2, N):
            nb = d
    n_steps = N // nb
    # TODO(synk): if N == 1 and L is very long, additionally tile L_out (with halo'd
    #             x windows) so both v7x TensorCores get work and VMEM stays bounded.

    use_mxu = C_in > 16   # tiny channels -> VPU FMA path; larger -> MXU

    # ---- specs: read x as-is (full-row blocks), write lane-dense padded NCL output ----
    x_spec = pl.BlockSpec((nb, C_in, L), lambda i: (i, 0, 0))
    w_spec = pl.BlockSpec((K, C_out_pad, C_in), lambda i: (0, 0, 0))
    shift_spec = pl.BlockSpec((C_out_pad, 1), lambda i: (0, 0))
    out_spec = pl.BlockSpec((nb, C_out_pad, L_out_pad), lambda i: (i, 0, 0))

    # ---- VMEM budget; raise the scoped limit only when a large config needs it ----
    x_blk = nb * C_in * L * x_isz
    o_blk = nb * C_out_pad * L_out_pad * out_isz
    w_bytes = K * C_out_pad * C_in * 4
    acc_bytes = C_out_pad * L_out_pad * 4
    vmem_need = 2 * (x_blk + o_blk + w_bytes + C_out_pad * 4) + acc_bytes
    compiler_kwargs = dict(dimension_semantics=("parallel",))
    if vmem_need > 12 * (1 << 20):
        try:
            vmem_cap = pltpu.get_tpu_info().vmem_capacity_bytes   # 64 MiB on v7x
        except Exception:
            vmem_cap = 64 * (1 << 20)
        compiler_kwargs["vmem_limit_bytes"] = int(
            min(max(int(1.5 * vmem_need), 16 * (1 << 20)), int(0.625 * vmem_cap)))

    cost = pl.CostEstimate(
        flops=int(2 * N * L * C_out * C_in * K),
        transcendentals=int(N * C_out_pad * L_out_pad),
        bytes_accessed=int(x.size * x_isz + wb.size * 4 + shift_b.size * 4
                           + N * C_out_pad * L_out_pad * out_isz),
    )

    kernel = functools.partial(_fused_conv_bn_silu_kernel,
                               K=K, padding=padding, nb=nb, use_mxu=use_mxu)

    out = pl.pallas_call(
        kernel,
        out_shape=jax.ShapeDtypeStruct((N, C_out_pad, L_out_pad), out_dtype),
        grid_spec=pltpu.PrefetchScalarGridSpec(
            num_scalar_prefetch=0,
            grid=(n_steps,),
            in_specs=[x_spec, w_spec, shift_spec],
            out_specs=out_spec,
            scratch_shapes=[pltpu.VMEM((C_out_pad, L_out_pad), jnp.float32)],
        ),
        compiler_params=pltpu.CompilerParams(**compiler_kwargs),
        cost_estimate=cost,
    )(x, wb, shift_b)

    if pad_output or (C_out_pad == C_out and L_out_pad == L_out):
        return out                                   # no un-pad copy needed
    return out[:, :C_out, :L_out]                    # NCL, un-padded


def _reference(x, weight, bias, gamma, beta, rm, rv, *, stride, padding, eps):
    y = jax.lax.conv_general_dilated(
        x, weight, window_strides=(stride,), padding=[(padding, padding)],
        dimension_numbers=("NCH", "OIH", "NCH"))
    y = y + bias[None, :, None]
    y = (y - rm[None, :, None]) / jnp.sqrt(rv[None, :, None] + eps)
    y = y * gamma[None, :, None] + beta[None, :, None]
    return y * jax.nn.sigmoid(y)


if __name__ == "__main__":
    # Module config: conv1d_bn_relu(in1=4, out1=8) with defaults kernel_size=1, stride=1, padding=9
    N, C_in, L = 2, 4, 16
    C_out, K, stride, padding = 8, 1, 1, 9

    key = jax.random.PRNGKey(0)
    kx, kw, kb = jax.random.split(key, 3)

    x = jax.random.normal(kx, (N, C_in, L), dtype=jnp.float32)

    # PyTorch-shaped parameters: Conv1d.weight (C_out, C_in, K), Conv1d.bias (C_out,)
    fan_in = C_in * K
    bound = 1.0 / (fan_in ** 0.5)
    weight = jax.random.uniform(kw, (C_out, C_in, K), jnp.float32, -bound, bound)
    bias = jax.random.uniform(kb, (C_out,), jnp.float32, -bound, bound)
    # BatchNorm1d fresh init: gamma=1, beta=0, running_mean=0, running_var=1
    gamma = jnp.ones((C_out,), jnp.float32)
    beta = jnp.zeros((C_out,), jnp.float32)
    running_mean = jnp.zeros((C_out,), jnp.float32)
    running_var = jnp.ones((C_out,), jnp.float32)

    fwd = jax.jit(lambda *a: conv1d_bn_silu(*a, stride=stride, padding=padding))
    out = jax.block_until_ready(
        fwd(x, weight, bias, gamma, beta, running_mean, running_var))

    ref = _reference(x, weight, bias, gamma, beta, running_mean, running_var,
                     stride=stride, padding=padding, eps=1e-5)
    assert out.shape == (N, C_out, L + 2 * padding - K + 1), out.shape
    # Full f32 path (no bf16 casts) -> tight tolerance vs the f32 reference.
    err = float(jnp.max(jnp.abs(out - ref)))
    assert jnp.allclose(out, ref, atol=1e-4, rtol=1e-4), err

    print("KERNEL_OK")
</pallas_src>

<mosaic_0001>
module attributes {stable_mosaic.version = 11 : i64} {
  func.func @_fused_conv_bn_silu_kernel(%arg0: i32, %arg1: memref<1x4x16xf32, #tpu.memory_space<vmem>>, %arg2: memref<1x8x4xf32, #tpu.memory_space<vmem>>, %arg3: memref<8x1xf32, #tpu.memory_space<vmem>>, %arg4: memref<1x8x128xf32, #tpu.memory_space<vmem>>, %arg5: memref<8x128xf32, #tpu.memory_space<vmem>>) attributes {dimension_semantics = [#tpu.dimension_semantics<parallel>], iteration_bounds = array<i64: 2>, scalar_prefetch = 0 : i64, scratch_operands = 1 : i64, tpu.core_type = #tpu.core_type<tc>, window_params = [{transform_indices = @transform_0, window_bounds = array<i64: 1, 4, 16>}, {pipeline_mode = #tpu.pipeline_mode<synchronous>, transform_indices = @transform_1, window_bounds = array<i64: 1, 8, 4>}, {pipeline_mode = #tpu.pipeline_mode<synchronous>, transform_indices = @transform_2, window_bounds = array<i64: 8, 1>}, {transform_indices = @transform_3, window_bounds = array<i64: 1, 8, 128>}]} {
    %c0 = arith.constant 0 : index
    %c0_0 = arith.constant 0 : index
    %0 = vector.load %arg3[%c0, %c0_0] : memref<8x1xf32, #tpu.memory_space<vmem>>, vector<8x1xf32>
    %c0_1 = arith.constant 0 : index
    %c0_2 = arith.constant 0 : index
    %c0_3 = arith.constant 0 : index
    %1 = vector.load %arg1[%c0_1, %c0_2, %c0_3] : memref<1x4x16xf32, #tpu.memory_space<vmem>>, vector<1x4x16xf32>
    %2 = vector.shape_cast %1 : vector<1x4x16xf32> to vector<4x16xf32>
    %cst = arith.constant 0.000000e+00 : f32
    %3 = vector.broadcast %cst : f32 to vector<8x128xf32>
    %c0_4 = arith.constant 0 : index
    %c0_5 = arith.constant 0 : index
    %4 = vector.load %arg5[%c0_4, %c0_5] : memref<8x128xf32, #tpu.memory_space<vmem>>, vector<8x128xf32>
    tpu.vector_store %arg5[%c0_4, %c0_5], %3 {strides = array<i32>} : memref<8x128xf32, #tpu.memory_space<vmem>>, vector<8x128xf32>,
    %c0_6 = arith.constant 0 : index
    %c0_7 = arith.constant 0 : index
    %c0_8 = arith.constant 0 : index
    %5 = vector.load %arg2[%c0_6, %c0_7, %c0_8] : memref<1x8x4xf32, #tpu.memory_space<vmem>>, vector<1x8x4xf32>
    %6 = vector.shape_cast %5 : vector<1x8x4xf32> to vector<8x4xf32>
    %7 = vector.extract_strided_slice %6 {offsets = [0, 0], sizes = [8, 1], strides = [1, 1]} : vector<8x4xf32> to vector<8x1xf32>
    %8 = vector.extract_strided_slice %2 {offsets = [0, 0], sizes = [1, 16], strides = [1, 1]} : vector<4x16xf32> to vector<1x16xf32>
    %9 = vector.broadcast %7 : vector<8x1xf32> to vector<8x16xf32>
    %10 = vector.broadcast %8 : vector<1x16xf32> to vector<8x16xf32>
    %11 = arith.mulf %9, %10 : vector<8x16xf32>
    %12 = vector.extract_strided_slice %6 {offsets = [0, 1], sizes = [8, 1], strides = [1, 1]} : vector<8x4xf32> to vector<8x1xf32>
    %13 = vector.extract_strided_slice %2 {offsets = [1, 0], sizes = [1, 16], strides = [1, 1]} : vector<4x16xf32> to vector<1x16xf32>
    %14 = vector.broadcast %12 : vector<8x1xf32> to vector<8x16xf32>
    %15 = vector.broadcast %13 : vector<1x16xf32> to vector<8x16xf32>
    %16 = arith.mulf %14, %15 : vector<8x16xf32>
    %17 = arith.addf %11, %16 : vector<8x16xf32>
    %18 = vector.extract_strided_slice %6 {offsets = [0, 2], sizes = [8, 1], strides = [1, 1]} : vector<8x4xf32> to vector<8x1xf32>
    %19 = vector.extract_strided_slice %2 {offsets = [2, 0], sizes = [1, 16], strides = [1, 1]} : vector<4x16xf32> to vector<1x16xf32>
    %20 = vector.broadcast %18 : vector<8x1xf32> to vector<8x16xf32>
    %21 = vector.broadcast %19 : vector<1x16xf32> to vector<8x16xf32>
    %22 = arith.mulf %20, %21 : vector<8x16xf32>
    %23 = arith.addf %17, %22 : vector<8x16xf32>
    %24 = vector.extract_strided_slice %6 {offsets = [0, 3], sizes = [8, 1], strides = [1, 1]} : vector<8x4xf32> to vector<8x1xf32>
    %25 = vector.extract_strided_slice %2 {offsets = [3, 0], sizes = [1, 16], strides = [1, 1]} : vector<4x16xf32> to vector<1x16xf32>
    %26 = vector.broadcast %24 : vector<8x1xf32> to vector<8x16xf32>
    %27 = vector.broadcast %25 : vector<1x16xf32> to vector<8x16xf32>
    %28 = arith.mulf %26, %27 : vector<8x16xf32>
    %29 = arith.addf %23, %28 : vector<8x16xf32>
    %c0_9 = arith.constant 0 : index
    %c9 = arith.constant 9 : index
    %30 = vector.load %arg5[%c0_9, %c9] : memref<8x128xf32, #tpu.memory_space<vmem>>, vector<8x16xf32>
    %31 = arith.addf %30, %29 : vector<8x16xf32>
    %c0_10 = arith.constant 0 : index
    %c9_11 = arith.constant 9 : index
    %32 = vector.load %arg5[%c0_10, %c9_11] : memref<8x128xf32, #tpu.memory_space<vmem>>, vector<8x16xf32>
    tpu.vector_store %arg5[%c0_10, %c9_11], %31 {strides = array<i32>} : memref<8x128xf32, #tpu.memory_space<vmem>>, vector<8x16xf32>,
    %c0_12 = arith.constant 0 : index
    %c0_13 = arith.constant 0 : index
    %33 = vector.load %arg5[%c0_12, %c0_13] : memref<8x128xf32, #tpu.memory_space<vmem>>, vector<8x128xf32>
    %34 = vector.broadcast %0 : vector<8x1xf32> to vector<8x128xf32>
    %35 = arith.addf %33, %34 : vector<8x128xf32>
    %36 = arith.negf %35 : vector<8x128xf32>
    %37 = math.exp %36 : vector<8x128xf32>
    %cst_14 = arith.constant 1.000000e+00 : f32
    %38 = vector.broadcast %cst_14 : f32 to vector<8x128xf32>
    %39 = arith.addf %38, %37 : vector<8x128xf32>
    %40 = arith.divf %38, %39 : vector<8x128xf32>
    %41 = arith.mulf %35, %40 : vector<8x128xf32>
    %c0_15 = arith.constant 0 : index
    %c0_16 = arith.constant 0 : index
    %c0_17 = arith.constant 0 : index
    %42 = vector.load %arg4[%c0_15, %c0_16, %c0_17] : memref<1x8x128xf32, #tpu.memory_space<vmem>>, vector<1x8x128xf32>
    %43 = vector.shape_cast %42 : vector<1x8x128xf32> to vector<8x128xf32>
    %44 = vector.shape_cast %41 : vector<8x128xf32> to vector<1x8x128xf32>
    tpu.vector_store %arg4[%c0_15, %c0_16, %c0_17], %44 {strides = array<i32>} : memref<1x8x128xf32, #tpu.memory_space<vmem>>, vector<1x8x128xf32>,
    return
  }
  func.func @transform_0(%arg0: i32) -> (i32, i32, i32) {
    %c0_i32 = arith.constant 0 : i32
    %c0_i32_0 = arith.constant 0 : i32
    %c0_i32_1 = arith.constant 0 : i32
    return %arg0, %c0_i32, %c0_i32_0 : i32, i32, i32
  }
  func.func @transform_1(%arg0: i32) -> (i32, i32, i32) {
    %c0_i32 = arith.constant 0 : i32
    %c0_i32_0 = arith.constant 0 : i32
    %c0_i32_1 = arith.constant 0 : i32
    %c0_i32_2 = arith.constant 0 : i32
    return %c0_i32, %c0_i32_0, %c0_i32_1 : i32, i32, i32
  }
  func.func @transform_2(%arg0: i32) -> (i32, i32) {
    %c0_i32 = arith.constant 0 : i32
    %c0_i32_0 = arith.constant 0 : i32
    %c0_i32_1 = arith.constant 0 : i32
    return %c0_i32, %c0_i32_0 : i32, i32
  }
  func.func @transform_3(%arg0: i32) -> (i32, i32, i32) {
    %c0_i32 = arith.constant 0 : i32
    %c0_i32_0 = arith.constant 0 : i32
    %c0_i32_1 = arith.constant 0 : i32
    return %arg0, %c0_i32, %c0_i32_0 : i32, i32, i32
  }
}

</mosaic_0001>

<llo_original>
// kernel: _lambda_.1
$region0: #{_lambda_.1}
  #allocation0 [shape = 'u32[]', space=smem, size = 0x4, offset = 0x4, fixed_abs, tag = 'smem constant byte address 0x4 - core index']
  #allocation1 [shape = 'u32[72,128]{1,0:T(1,128)}', space=vmem, size = 0x9000, scoped, tag = 'internal scratch']
  #allocation2 [shape = 'f32[8,128]{1,0:T(8,128)}', space=vmem, size = 0x1000, scoped, tag = 'scratch operand']
  %s0 = inlined_call_operand.vmem [shape: f32[2,4,16], index: 0, kind: input, shape index: {}]
  %s1 = inlined_call_operand.vmem [shape: f32[1,8,4], index: 1, kind: input, shape index: {}]
  %s2 = inlined_call_operand.vmem [shape: f32[8,1], index: 2, kind: input, shape index: {}]
  %s3 = inlined_call_operand.hbm [shape: f32[2,8,128], index: 3, kind: output, shape index: {}]
  %s4 = sld [smem:[#allocation0]]
  $region45: #{_lambda_.1} parent=0
    _
  %s6 = ssub.s32 1, %s4
  %s7 = scalar_select 0, %s6, %s4
  $region1: #{_lambda_.1} parent=0
    #allocation3 [shape = 'u8[8192]{0}', space=vmem, size = 0x2000, scoped, tag = 'output window, operand 0']
    #allocation4 [shape = 's32[2]{0}', space=sflag, size = 0x8, scoped, tag = 'scoped memory for _lambda_.1']
    %8 = vsyncpa [#allocation4], 0
    %s9 = scalar_lea.sflag [#allocation4], 1
    %10 = vsyncpa %s9, 0
    loop: start=0, step=1, limit=4
    $region2: #{_lambda_.1} parent=1 // loop_pre_header
      _
    $region3: #{_lambda_.1} parent=1 // loop_header
      %s12 = sphi 0, %s16
      %p13 = scmp.ge.s32.totalorder %s12, 4
      %s22 = sphi 0, %s24
      %s25 = sphi 0, %s22
      %s26 = sphi 0, %s25
      %s42 = sphi 0, %s26
      %s46 = sphi 0, %s46
      %s48 = sphi 0, %s46
      %s49 = sphi 0, %s48
      %s63 = sphi 0, %s49
      %s67 = sphi 0, %s67
      %s69 = sphi 0, %s67
      %s70 = sphi 0, %s69
      %s84 = sphi 0, %s70
      %s90 = sphi 0, %s92
      %s93 = sphi 0, %s90
      %s94 = sphi 0, %s93
      %s110 = sphi 0, %s94
    $region4: #{_lambda_.1} parent=1 // loop_header_branch
      %15 = sbr.rel (%p13) target = $region8
    $region5: #{_lambda_.1} parent=1 // loop_body
      %s17 = ssub.s32 %s12, 1
      %s18 = ssub.s32 %s12, 2
      %s19 = sadd.s32 %s12, 1
      %s20 = ssub.s32 %s12, %s19
      %p21 = scmp.eq.s32.totalorder %s20, 0
      %s23 = sadd.s32 %s22, 1
      %s24 = scalar_select %p21, %s22, %s23
      %p27 = pneg %p21
      %p28 = scmp.eq.s32.totalorder %s12, 1
      %p29 = por %p27, %p28
      %p30 = scmp.ne.s32.totalorder %s22, %s25
      %p31 = scmp.eq.s32.totalorder %s12, 0
      %p32 = por %p30, %p31
      %p33 = scmp.ne.s32.totalorder %s22, %s25
      %p34 = scmp.eq.s32.totalorder %s17, 1
      %p35 = por %p33, %p34
      %p36 = scmp.ne.s32.totalorder %s25, %s26
      %p37 = scmp.eq.s32.totalorder %s17, 0
      %p38 = por %p36, %p37
      %p39 = scmp.ne.s32.totalorder %s25, %s26
      %p40 = scmp.eq.s32.totalorder %s18, 1
      %p41 = por %p39, %p40
      %p43 = scmp.ne.s32.totalorder %s26, %s42
      %p44 = scmp.eq.s32.totalorder %s18, 0
      %p45 = por %p43, %p44
      %s47 = sadd.s32 %s46, 1
      %p50 = scmp.eq.s32.totalorder %s12, 1
      %p51 = scmp.ne.s32.totalorder %s46, %s48
      %p52 = scmp.eq.s32.totalorder %s12, 0
      %p53 = por %p51, %p52
      %p54 = scmp.ne.s32.totalorder %s46, %s48
      %p55 = scmp.eq.s32.totalorder %s17, 1
      %p56 = por %p54, %p55
      %p57 = scmp.ne.s32.totalorder %s48, %s49
      %p58 = scmp.eq.s32.totalorder %s17, 0
      %p59 = por %p57, %p58
      %p60 = scmp.ne.s32.totalorder %s48, %s49
      %p61 = scmp.eq.s32.totalorder %s18, 1
      %p62 = por %p60, %p61
      %p64 = scmp.ne.s32.totalorder %s49, %s63
      %p65 = scmp.eq.s32.totalorder %s18, 0
      %p66 = por %p64, %p65
      %s68 = sadd.s32 %s67, 1
      %p71 = scmp.eq.s32.totalorder %s12, 1
      %p72 = scmp.ne.s32.totalorder %s67, %s69
      %p73 = scmp.eq.s32.totalorder %s12, 0
      %p74 = por %p72, %p73
      %p75 = scmp.ne.s32.totalorder %s67, %s69
      %p76 = scmp.eq.s32.totalorder %s17, 1
      %p77 = por %p75, %p76
      %p78 = scmp.ne.s32.totalorder %s69, %s70
      %p79 = scmp.eq.s32.totalorder %s17, 0
      %p80 = por %p78, %p79
      %p81 = scmp.ne.s32.totalorder %s69, %s70
      %p82 = scmp.eq.s32.totalorder %s18, 1
      %p83 = por %p81, %p82
      %p85 = scmp.ne.s32.totalorder %s70, %s84
      %p86 = scmp.eq.s32.totalorder %s18, 0
      %p87 = por %p85, %p86
      %s88 = ssub.s32 %s12, %s19
      %p89 = scmp.eq.s32.totalorder %s88, 0
      %s91 = sadd.s32 %s90, 1
      %s92 = scalar_select %p89, %s90, %s91
      %p95 = pneg %p89
      %p96 = scmp.eq.s32.totalorder %s12, 1
      %p97 = por %p95, %p96
      %p98 = scmp.ne.s32.totalorder %s90, %s93
      %p99 = scmp.eq.s32.totalorder %s12, 0
      %p100 = por %p98, %p99
      %p101 = scmp.ne.s32.totalorder %s90, %s93
      %p102 = scmp.eq.s32.totalorder %s17, 1
      %p103 = por %p101, %p102
      %p104 = scmp.ne.s32.totalorder %s93, %s94
      %p105 = scmp.eq.s32.totalorder %s17, 0
      %p106 = por %p104, %p105
      %p107 = scmp.ne.s32.totalorder %s93, %s94
      %p108 = scmp.eq.s32.totalorder %s18, 1
      %p109 = por %p107, %p108
      %p111 = scmp.ne.s32.totalorder %s94, %s110
      %p112 = scmp.eq.s32.totalorder %s18, 0
      %p113 = por %p111, %p112
      %p114 = scmp.le.s32.totalorder 1, %s12
      %p115 = scmp.lt.s32.totalorder %s12, 3
      %p116 = pnand %p114, %p115
      %p117 = pneg %p116
      // Predicated region
      $region9: #{_lambda_.1} parent=5 // pred_check
        _
      $region10: #{_lambda_.1} parent=5 // pred_check_branch
        %119 = sbr.rel (%p116) target = $region12
      $region11: #{_lambda_.1} parent=5 // pred_region
        %s120 = ssub.s32 %s12, 1
        // Predicated region
        $region13: #{_lambda_.1} parent=11 // pred_check
          %p121 = pneg %p59
        $region14: #{_lambda_.1} parent=11 // pred_check_branch
          %123 = sbr.rel (%p121) target = $region16
        $region15: #{_lambda_.1} parent=11 // pred_region
          _
        $region16: #{_lambda_.1} parent=11 // pred_fallthru
          _
        // Predicated region
        $region17: #{_lambda_.1} parent=11 // pred_check
          %p124 = pneg %p80
        $region18: #{_lambda_.1} parent=11 // pred_check_branch
          %126 = sbr.rel (%p124) target = $region20
        $region19: #{_lambda_.1} parent=11 // pred_region
          _
        $region20: #{_lambda_.1} parent=11 // pred_fallthru
          _
      $region12: #{_lambda_.1} parent=5 // pred_fallthru
        _
      %p127 = scmp.lt.s32.totalorder %s12, 2
      // Predicated region
      $region21: #{_lambda_.1} parent=5 // pred_check
        %p128 = pneg %p127
      $region22: #{_lambda_.1} parent=5 // pred_check_branch
        %130 = sbr.rel (%p128) target = $region24
      $region23: #{_lambda_.1} parent=5 // pred_region
        // Predicated region
        $region25: #{_lambda_.1} parent=23 // pred_check
          %p131 = pneg %p32
        $region26: #{_lambda_.1} parent=23 // pred_check_branch
          %133 = sbr.rel (%p131) target = $region28
        $region27: #{_lambda_.1} parent=23 // pred_region
          %p134 = scmp.lt.s32.totalorder %s12, 1
          %s135 = scalar_select %p134, %s12, 1
          %s136 = smul.addr %s135, 4
          %s137 = scalar_lea.vmem %s0, %s136
        $region28: #{_lambda_.1} parent=23 // pred_fallthru
          _
      $region24: #{_lambda_.1} parent=5 // pred_fallthru
        _
      %p138 = scmp.le.s32.totalorder 1, %s12
      %p139 = scmp.lt.s32.totalorder %s12, 3
      %p140 = pnand %p138, %p139
      %p141 = pneg %p140
      // Predicated region
      $region29: #{_lambda_.1} parent=5 // pred_check
        _
      $region30: #{_lambda_.1} parent=5 // pred_check_branch
        %143 = sbr.rel (%p140) target = $region32
      $region31: #{_lambda_.1} parent=5 // pred_region
        %s144 = ssub.s32 %s12, 1
        %p145 = scmp.lt.s32.totalorder %s17, 1
        %s146 = scalar_select %p145, %s17, 1
        %s147 = smul.addr %s146, 4
        %s148 = scalar_lea.vmem %s0, %s147
        %p149 = pneg %p38
        %p150 = pneg %p35
        %p151 = pneg %p59
        %p152 = pneg %p56
        %p153 = pneg %p80
        %p154 = pneg %p77
        %p155 = pneg %p106
        %p156 = pneg %p103
        %s157 = sand.u32 %s93, 1
        %s158 = scalar_lea.sflag [#allocation4], %s157
        %s159 = sand.u32 %s93, 1
        %s160 = smul.addr %s159, 8
        %s161 = scalar_lea.vmem [#allocation3], %s160
        %p162 = scmp.lt.s32.totalorder %s17, 1
        %s163 = scalar_select %p162, %s17, 1
        %s164 = smul.addr %s163, 4
        %s165 = scalar_lea.vmem %s0, %s164
        %v166 = vld [vmem:[%s2] sm:$0xff]
        %v167 = vld [vmem:[%s165] sm:$0xf]
        %168 = vst [vmem:[#allocation2] sm:$0xff] 0.0
        %v169 = vld [vmem:[%s1] sm:$0xff]
        %171 = vset.pattern.permute.xlu0 0
        %172 = vperm.xlu0 %171, %v169
        %v173 = vpop.permute.xlu0 %172
        %v175 = vperm.slane %v167, 0
        %v176 = vmul.f32 %v173, %v175
        %177 = vset.pattern.permute.xlu0 1
        %178 = vperm.xlu0 %177, %v169
        %v179 = vpop.permute.xlu0 %178
        %v181 = vperm.slane %v167, 1
        %v182 = vmul.f32 %v179, %v181
        %v183 = vadd.f32 %v176, %v182
        %184 = vset.pattern.permute.xlu0 2
        %185 = vperm.xlu0 %184, %v169
        %v186 = vpop.permute.xlu0 %185
        %v188 = vperm.slane %v167, 2
        %v189 = vmul.f32 %v186, %v188
        %v190 = vadd.f32 %v183, %v189
        %191 = vset.pattern.permute.xlu0 3
        %192 = vperm.xlu0 %191, %v169
        %v193 = vpop.permute.xlu0 %192
        %v195 = vperm.slane %v167, 3
        %v196 = vmul.f32 %v193, %v195
        %v197 = vadd.f32 %v190, %v196
        %v198 = vld [vmem:[#allocation2] sm:$0xff]
        %200 = vrot.lane.b32.xlu0 %v197, 9
        %v201 = vpop.permute.xlu0 %200
        %v203 = vadd.f32 %v198, %v201
        %vm204 = vcmask 203848
        %205 = vst.msk [vmem:[#allocation2] sm:$0xff] %vm204, %v203
        %v206 = vld [vmem:[#allocation2] sm:$0xff]
        %208 = vset.pattern.permute.xlu0 0
        %209 = vperm.xlu0 %208, %v166
        %v210 = vpop.permute.xlu0 %209
        %v212 = vadd.f32 %v206, %v210
        %v213 = vxor.u32 %v212, 2147483648
        %v214 = vmul.f32 %v213, 1.442695
        %v215 = vpow.pop %v214
        %v216 = vadd.f32 %v215, 1.0
        %v217 = vrcp.pop %v216
        %v218 = vmul.f32 %v216, %v217
        %v219 = vsub.f32 1.0, %v218
        %v220 = vmul.f32 %v217, %v219
        %v221 = vadd.f32 %v217, %v220
        %vm222 = vweird.f32 %v216
        %vm223 = vweird.f32 %v217
        %vm224 = vmor %vm222, %vm223
        %v225 = vsel %vm224, %v217, %v221
        %v226 = vand.u32 2147483647, %v216
        %vm227 = vcmp.eq.f32.partialorder %v226, 8.507059e+37
        %v228 = vand.u32 %v216, 2147483648
        %v229 = vor.u32 1.1754944e-38, %v228
        %v230 = vsel %vm227, %v229, %v225
        %v231 = vmul.f32 1.0, %v230
        %v232 = vmul.f32 %v212, %v231
        %233 = vst [vmem:[%s161] sm:$0xff] %v232
        %s234 = sand.u32 %s93, 1
        %s235 = scalar_lea.sflag [#allocation4], %s234
        %s236 = sand.u32 %s93, 1
        %s237 = smul.addr %s236, 8
        %s238 = scalar_lea.vmem [#allocation3], %s237
        // Predicated region
        $region33: #{_lambda_.1} parent=31 // pred_check
          %p239 = pneg %p103
        $region34: #{_lambda_.1} parent=31 // pred_check_branch
          %241 = sbr.rel (%p239) target = $region36
        $region35: #{_lambda_.1} parent=31 // pred_region
          %243 = vsyncadd %s235, 0
          %s244 = smul.addr %s17, 8
          %s245 = scalar_lea.hbm %s3, %s244
          %s247 = sshll.u32 %s238, 4
          %s248 = int_to_ptr.vmem [resolvable:$true] %s247
          %s249 = sshll.u32 %s245, 4
          %s250 = int_to_ptr.hbm [resolvable:$true] %s249
          %252 = dma.vmem_to_hbm [thread:$0]  %s248, 128, %s250, %s235
        $region36: #{_lambda_.1} parent=31 // pred_fallthru
          _
      $region32: #{_lambda_.1} parent=5 // pred_fallthru
        _
      %p253 = scmp.le.s32.totalorder 2, %s12
      // Predicated region
      $region37: #{_lambda_.1} parent=5 // pred_check
        %p254 = pneg %p253
      $region38: #{_lambda_.1} parent=5 // pred_check_branch
        %256 = sbr.rel (%p254) target = $region40
      $region39: #{_lambda_.1} parent=5 // pred_region
        %s257 = ssub.s32 %s12, 2
        // Predicated region
        $region41: #{_lambda_.1} parent=39 // pred_check
          %p258 = pneg %p109
        $region42: #{_lambda_.1} parent=39 // pred_check_branch
          %260 = sbr.rel (%p258) target = $region44
        $region43: #{_lambda_.1} parent=39 // pred_region
          %s261 = sand.u32 %s94, 1
          %s262 = scalar_lea.sflag [#allocation4], %s261
          %s263 = sand.u32 %s94, 1
          %s264 = smul.addr %s263, 8
          %s265 = scalar_lea.vmem [#allocation3], %s264
          %267 = dma.done %s262, 128
        $region44: #{_lambda_.1} parent=39 // pred_fallthru
          _
      $region40: #{_lambda_.1} parent=5 // pred_fallthru
        _
    $region6: #{_lambda_.1} parent=1 // loop_footer
      %s16 = sadd.s32 1, %s12
    $region7: #{_lambda_.1} parent=1 // loop_footer_branch
      %11 = sbr.rel target = $region3
    $region8: #{_lambda_.1} parent=1 // loop_exit
      _
    %268 = vsyncpa [#allocation4], 1
    %s269 = scalar_lea.sflag [#allocation4], 1
    %270 = vsyncpa %s269, 1

</llo_original>
